<compile_context>
chip_gen: v7x
topology: tpu7x:2x2x1
jax: 0.10.0
libtpu: 0.0.40
codegen_flags: <defaults>
</compile_context>

<pallas_src>
import functools

import jax
import jax.numpy as jnp
from jax.experimental import pallas as pl
from jax.experimental.pallas import tpu as pltpu


_ACTIVATIONS = {
    "tanh": jnp.tanh,
    "relu": lambda v: jnp.maximum(v, 0.0),
    # Explicit form so it lowers to exp + div on the EUP/VPU.
    "sigmoid": lambda v: 1.0 / (1.0 + jnp.exp(-v)),
}


def _round_up(n, m):
    return ((n + m - 1) // m) * m


def _activation_dtype():
    """bf16 activation math on chips with a bf16 VPU/EUP; f32 otherwise."""
    try:
        kind = jax.devices()[0].device_kind.lower()
    except Exception:
        kind = ""
    if any(tag in kind for tag in ("v2", "v3", "v4", "v5")):
        return jnp.float32
    return jnp.bfloat16


def _choose_tile(B, max_tile_b):
    """Batch tile size / count.  No forced split on single-TC chips; even
    tile count when we do split so the v7x megacore stays balanced."""
    tile_b = max(8, min(max_tile_b, _round_up(B, 8)))
    num_tiles = pl.cdiv(B, tile_b)
    if num_tiles > 1 and num_tiles % 2 == 1:
        num_tiles += 1
        tile_b = max(8, _round_up(pl.cdiv(B, num_tiles), 8))
        num_tiles = pl.cdiv(B, tile_b)
    return tile_b, num_tiles


# ----------------------------------------------------------------------------
# Pallas kernel: fused 3-layer MLP value head
# ----------------------------------------------------------------------------
def _value_mlp_kernel(x_ref, w1_ref, b1_ref, w2_ref, b2_ref, w3_ref, b3_ref,
                      o_ref, *, act_fn, act_dtype):
    cdt = jnp.bfloat16  # MXU operand dtype

    # Layer 1: (TB, S) @ (S, H1) -> f32 accum, f32 bias, activation.
    x = x_ref[...].astype(cdt)
    h1 = jnp.dot(x, w1_ref[...].astype(cdt),
                 preferred_element_type=jnp.float32)
    h1 = h1 + b1_ref[...].astype(jnp.float32)
    h1 = act_fn(h1.astype(act_dtype))

    # Layer 2: (TB, H1) @ (H1, H2) -> f32 accum, f32 bias, activation.
    h2 = jnp.dot(h1.astype(cdt), w2_ref[...].astype(cdt),
                 preferred_element_type=jnp.float32)
    h2 = h2 + b2_ref[...].astype(jnp.float32)
    h2 = act_fn(h2.astype(act_dtype))

    # Value head, lane-dense: (1, H2) . (TB, H2)^T -> (1, TB)
    # (same last-dim contraction as q @ k^T; batch ends up on lanes so the
    #  store is a dense row instead of a masked (TB, 1) column).
    v = jax.lax.dot_general(
        w3_ref[...].astype(cdt), h2.astype(cdt),
        dimension_numbers=(((1,), (1,)), ((), ())),
        preferred_element_type=jnp.float32)
    v = v + b3_ref[0]                       # scalar bias from SMEM
    o_ref[...] = v.astype(o_ref.dtype)


def value_forward(x, params, *, activation="tanh", max_tile_b=512):
    """Fused forward of Value: Linear -> act -> Linear -> act -> Linear."""
    w1, b1, w2, b2, w3, b3 = params
    B, state_dim = x.shape
    H1 = w1.shape[1]
    H2 = w2.shape[1]
    w3_row = w3.reshape(1, H2)                       # (H2, 1) -> (1, H2)
    b3_s = b3.reshape(-1)[:1].astype(jnp.float32)    # (1,) scalar for SMEM

    tile_b, num_tiles = _choose_tile(B, max_tile_b)

    act_fn = _ACTIVATIONS[activation]
    kernel = functools.partial(_value_mlp_kernel, act_fn=act_fn,
                               act_dtype=_activation_dtype())

    out = pl.pallas_call(
        kernel,
        out_shape=jax.ShapeDtypeStruct((num_tiles, tile_b), x.dtype),
        grid_spec=pltpu.PrefetchScalarGridSpec(
            num_scalar_prefetch=0,
            grid=(num_tiles,),
            in_specs=[
                pl.BlockSpec((tile_b, state_dim), lambda i: (i, 0)),  # x tile
                pl.BlockSpec((state_dim, H1), lambda i: (0, 0)),      # W1
                pl.BlockSpec((1, H1), lambda i: (0, 0)),              # b1
                pl.BlockSpec((H1, H2), lambda i: (0, 0)),             # W2
                pl.BlockSpec((1, H2), lambda i: (0, 0)),              # b2
                pl.BlockSpec((1, H2), lambda i: (0, 0)),              # W3 row
                pl.BlockSpec(memory_space=pltpu.MemorySpace.SMEM),    # b3
            ],
            out_specs=pl.BlockSpec((1, tile_b), lambda i: (i, 0)),
        ),
        compiler_params=pltpu.CompilerParams(
            dimension_semantics=("parallel",)),
    )(x, w1, b1, w2, b2, w3_row, b3_s)

    out = out.reshape(num_tiles * tile_b, 1)
    return out[:B] if num_tiles * tile_b != B else out


# ----------------------------------------------------------------------------
# Parameter init matching nn.Linear defaults + Value's head scaling
# ----------------------------------------------------------------------------
def init_value_params(key, state_dim, hidden_size=(128, 128),
                      dtype=jnp.float32):
    """nn.Linear default U(-1/sqrt(fan_in), 1/sqrt(fan_in)) init, with
    value_head.weight *= 0.1 and value_head.bias *= 0.0."""
    dims = [state_dim] + list(hidden_size) + [1]
    params = []
    keys = jax.random.split(key, 2 * (len(dims) - 1))
    for li in range(len(dims) - 1):
        fan_in, fan_out = dims[li], dims[li + 1]
        bound = 1.0 / (fan_in ** 0.5)
        w = jax.random.uniform(keys[2 * li], (fan_in, fan_out),
                               minval=-bound, maxval=bound, dtype=dtype)
        b = jax.random.uniform(keys[2 * li + 1], (1, fan_out),
                               minval=-bound, maxval=bound, dtype=dtype)
        if li == len(dims) - 2:  # value head
            w = w * 0.1
            b = b * 0.0
        params.append(w)
        params.append(b)
    return tuple(params)


# Pure-JAX f32 reference for correctness checks.
def _value_ref(xs, params, activation="tanh"):
    w1, b1, w2, b2, w3, b3 = params
    act = _ACTIVATIONS[activation]
    h1 = act(xs @ w1 + b1)
    h2 = act(h1 @ w2 + b2)
    return h2 @ w3 + b3


if __name__ == "__main__":
    key = jax.random.PRNGKey(0)
    k_param, k_x, k_x2 = jax.random.split(key, 3)

    state_dim = 32
    hidden_size = (128, 128)
    batch = 16

    params = init_value_params(k_param, state_dim, hidden_size)
    x = jax.random.normal(k_x, (batch, state_dim), dtype=jnp.float32)

    # Single-tile path, all three activations (bf16 MXU operands -> compare
    # against the f32 reference with a bf16-appropriate tolerance).
    for act in ("tanh", "relu", "sigmoid"):
        y = jax.block_until_ready(value_forward(x, params, activation=act))
        ref = _value_ref(x, params, activation=act)
        assert y.shape == (batch, 1)
        assert jnp.allclose(y, ref, atol=1e-2, rtol=1e-2), act

    # Multi-tile path (even tile count, padded last tile sliced off).
    x2 = jax.random.normal(k_x2, (200, state_dim), dtype=jnp.float32)
    y2 = jax.block_until_ready(
        value_forward(x2, params, activation="tanh", max_tile_b=64))
    ref2 = _value_ref(x2, params, activation="tanh")
    assert y2.shape == (200, 1)
    assert jnp.allclose(y2, ref2, atol=1e-2, rtol=1e-2)

    print("KERNEL_OK")
</pallas_src>

<mosaic_0001>
module attributes {stable_mosaic.version = 11 : i64} {
  func.func @_value_mlp_kernel(%arg0: i32, %arg1: memref<16x32xf32, #tpu.memory_space<vmem>>, %arg2: memref<32x128xf32, #tpu.memory_space<vmem>>, %arg3: memref<1x128xf32, #tpu.memory_space<vmem>>, %arg4: memref<128x128xf32, #tpu.memory_space<vmem>>, %arg5: memref<1x128xf32, #tpu.memory_space<vmem>>, %arg6: memref<1x128xf32, #tpu.memory_space<vmem>>, %arg7: memref<1xf32, #tpu.memory_space<smem>>, %arg8: memref<1x16xf32, #tpu.memory_space<vmem>>) attributes {dimension_semantics = [#tpu.dimension_semantics<parallel>], iteration_bounds = array<i64: 1>, scalar_prefetch = 0 : i64, scratch_operands = 0 : i64, tpu.core_type = #tpu.core_type<tc>, window_params = [{transform_indices = @transform_0, window_bounds = array<i64: 16, 32>}, {pipeline_mode = #tpu.pipeline_mode<synchronous>, transform_indices = @transform_1, window_bounds = array<i64: 32, 128>}, {pipeline_mode = #tpu.pipeline_mode<synchronous>, transform_indices = @transform_2, window_bounds = array<i64: 1, 128>}, {pipeline_mode = #tpu.pipeline_mode<synchronous>, transform_indices = @transform_3, window_bounds = array<i64: 128, 128>}, {pipeline_mode = #tpu.pipeline_mode<synchronous>, transform_indices = @transform_4, window_bounds = array<i64: 1, 128>}, {pipeline_mode = #tpu.pipeline_mode<synchronous>, transform_indices = @transform_5, window_bounds = array<i64: 1, 128>}, {transform_indices = @transform_6, window_bounds = array<i64: 1>}, {transform_indices = @transform_7, window_bounds = array<i64: 1, 16>}]} {
    %c0 = arith.constant 0 : index
    %c0_0 = arith.constant 0 : index
    %0 = vector.load %arg1[%c0, %c0_0] : memref<16x32xf32, #tpu.memory_space<vmem>>, vector<16x32xf32>
    %1 = arith.truncf %0 : vector<16x32xf32> to vector<16x32xbf16>
    %c0_1 = arith.constant 0 : index
    %c0_2 = arith.constant 0 : index
    %2 = vector.load %arg2[%c0_1, %c0_2] : memref<32x128xf32, #tpu.memory_space<vmem>>, vector<32x128xf32>
    %3 = arith.truncf %2 : vector<32x128xf32> to vector<32x128xbf16>
    %cst = arith.constant dense<0.000000e+00> : vector<16x128xf32>
    %4 = tpu.matmul %1, %3, %cst {dimension_numbers = #tpu.dot_dimension_numbers<[1], [0], [0], [1], [0, 0, 1, 1], [], []>} : vector<16x32xbf16>, vector<32x128xbf16>, vector<16x128xf32> -> vector<16x128xf32>
    %c0_3 = arith.constant 0 : index
    %c0_4 = arith.constant 0 : index
    %5 = vector.load %arg3[%c0_3, %c0_4] : memref<1x128xf32, #tpu.memory_space<vmem>>, vector<1x128xf32>
    %6 = vector.broadcast %5 : vector<1x128xf32> to vector<16x128xf32>
    %7 = arith.addf %4, %6 : vector<16x128xf32>
    %8 = arith.truncf %7 : vector<16x128xf32> to vector<16x128xbf16>
    %9 = math.tanh %8 : vector<16x128xbf16>
    %c0_5 = arith.constant 0 : index
    %c0_6 = arith.constant 0 : index
    %10 = vector.load %arg4[%c0_5, %c0_6] : memref<128x128xf32, #tpu.memory_space<vmem>>, vector<128x128xf32>
    %11 = arith.truncf %10 : vector<128x128xf32> to vector<128x128xbf16>
    %cst_7 = arith.constant dense<0.000000e+00> : vector<16x128xf32>
    %12 = tpu.matmul %9, %11, %cst_7 {dimension_numbers = #tpu.dot_dimension_numbers<[1], [0], [0], [1], [0, 0, 1, 1], [], []>} : vector<16x128xbf16>, vector<128x128xbf16>, vector<16x128xf32> -> vector<16x128xf32>
    %c0_8 = arith.constant 0 : index
    %c0_9 = arith.constant 0 : index
    %13 = vector.load %arg5[%c0_8, %c0_9] : memref<1x128xf32, #tpu.memory_space<vmem>>, vector<1x128xf32>
    %14 = vector.broadcast %13 : vector<1x128xf32> to vector<16x128xf32>
    %15 = arith.addf %12, %14 : vector<16x128xf32>
    %16 = arith.truncf %15 : vector<16x128xf32> to vector<16x128xbf16>
    %17 = math.tanh %16 : vector<16x128xbf16>
    %c0_10 = arith.constant 0 : index
    %c0_11 = arith.constant 0 : index
    %18 = vector.load %arg6[%c0_10, %c0_11] : memref<1x128xf32, #tpu.memory_space<vmem>>, vector<1x128xf32>
    %19 = arith.truncf %18 : vector<1x128xf32> to vector<1x128xbf16>
    %cst_12 = arith.constant dense<0.000000e+00> : vector<1x16xf32>
    %20 = tpu.matmul %19, %17, %cst_12 {dimension_numbers = #tpu.dot_dimension_numbers<[1], [1], [0], [0], [0, 0, 1, 0], [], []>} : vector<1x128xbf16>, vector<16x128xbf16>, vector<1x16xf32> -> vector<1x16xf32>
    %c0_13 = arith.constant 0 : index
    %21 = memref.load %arg7[%c0_13] : memref<1xf32, #tpu.memory_space<smem>>
    %22 = vector.broadcast %21 : f32 to vector<1x16xf32>
    %23 = arith.addf %20, %22 : vector<1x16xf32>
    %c0_14 = arith.constant 0 : index
    %c0_15 = arith.constant 0 : index
    %24 = vector.load %arg8[%c0_14, %c0_15] : memref<1x16xf32, #tpu.memory_space<vmem>>, vector<1x16xf32>
    tpu.vector_store %arg8[%c0_14, %c0_15], %23 {strides = array<i32>} : memref<1x16xf32, #tpu.memory_space<vmem>>, vector<1x16xf32>,
    return
  }
  func.func @transform_0(%arg0: i32) -> (i32, i32) {
    %c0_i32 = arith.constant 0 : i32
    %c0_i32_0 = arith.constant 0 : i32
    return %arg0, %c0_i32 : i32, i32
  }
  func.func @transform_1(%arg0: i32) -> (i32, i32) {
    %c0_i32 = arith.constant 0 : i32
    %c0_i32_0 = arith.constant 0 : i32
    %c0_i32_1 = arith.constant 0 : i32
    return %c0_i32, %c0_i32_0 : i32, i32
  }
  func.func @transform_2(%arg0: i32) -> (i32, i32) {
    %c0_i32 = arith.constant 0 : i32
    %c0_i32_0 = arith.constant 0 : i32
    %c0_i32_1 = arith.constant 0 : i32
    return %c0_i32, %c0_i32_0 : i32, i32
  }
  func.func @transform_3(%arg0: i32) -> (i32, i32) {
    %c0_i32 = arith.constant 0 : i32
    %c0_i32_0 = arith.constant 0 : i32
    %c0_i32_1 = arith.constant 0 : i32
    return %c0_i32, %c0_i32_0 : i32, i32
  }
  func.func @transform_4(%arg0: i32) -> (i32, i32) {
    %c0_i32 = arith.constant 0 : i32
    %c0_i32_0 = arith.constant 0 : i32
    %c0_i32_1 = arith.constant 0 : i32
    return %c0_i32, %c0_i32_0 : i32, i32
  }
  func.func @transform_5(%arg0: i32) -> (i32, i32) {
    %c0_i32 = arith.constant 0 : i32
    %c0_i32_0 = arith.constant 0 : i32
    %c0_i32_1 = arith.constant 0 : i32
    return %c0_i32, %c0_i32_0 : i32, i32
  }
  func.func @transform_6(%arg0: i32) -> i32 {
    %c0_i32 = arith.constant 0 : i32
    %c0_i32_0 = arith.constant 0 : i32
    return %c0_i32 : i32
  }
  func.func @transform_7(%arg0: i32) -> (i32, i32) {
    %c0_i32 = arith.constant 0 : i32
    %c0_i32_0 = arith.constant 0 : i32
    return %arg0, %c0_i32 : i32, i32
  }
}

</mosaic_0001>

<llo_original>
// kernel: tpu_custom_call.1
$region0: #{tpu_custom_call.1}
  #allocation0 [shape = 'u32[]', space=smem, size = 0x4, offset = 0x4, fixed_abs, tag = 'smem constant byte address 0x4 - core index']
  #allocation1 [shape = 'u32[144,128]{1,0:T(1,128)}', space=vmem, size = 0x12000, scoped, tag = 'internal scratch']
  #allocation2 [shape = 'f32[1]{0:T(128)S(6)}', space=smem, size = 0x200, scoped, tag = 'scoped memory for tpu_custom_call.1']
  %s0 = inlined_call_operand.hbm [shape: f32[16,32], index: 0, kind: input, shape index: {}]
  %s1 = inlined_call_operand.hbm [shape: f32[32,128], index: 1, kind: input, shape index: {}]
  %s2 = inlined_call_operand.vmem [shape: f32[1,128], index: 2, kind: input, shape index: {}]
  %s3 = inlined_call_operand.hbm [shape: f32[128,128], index: 3, kind: input, shape index: {}]
  %s4 = inlined_call_operand.vmem [shape: f32[1,128], index: 4, kind: input, shape index: {}]
  %s5 = inlined_call_operand.vmem [shape: f32[1,128], index: 5, kind: input, shape index: {}]
  %s6 = inlined_call_operand.<no memory space> [shape: f32[1], index: 6, kind: input, shape index: {}]
  %s7 = inlined_call_operand.hbm [shape: f32[1,16], index: 7, kind: output, shape index: {}]
  %s8 = sld [smem:[#allocation0]]
  $region50: #{tpu_custom_call.1} parent=0
    _
  %s10 = ssub.s32 1, %s8
  %s11 = scalar_select 0, %s10, %s8
  %12 = sst [smem:[#allocation2]] %s6
  $region1: #{tpu_custom_call.1} parent=0
    #allocation3 [shape = 'u8[8192]{0}', space=vmem, size = 0x2000, scoped, tag = 'input window, operand 0, single buffered']
    #allocation4 [shape = 's32[1]{0}', space=sflag, size = 0x4, scoped, tag = 'scoped memory for tpu_custom_call.1']
    #allocation5 [shape = 's32[1]{0}', space=sflag, size = 0x4, scoped, tag = 'scoped memory for tpu_custom_call.1']
    #allocation6 [shape = 'u8[16384]{0}', space=vmem, size = 0x4000, scoped, tag = 'input window, operand 1, single buffered']
    #allocation7 [shape = 's32[1]{0}', space=sflag, size = 0x4, scoped, tag = 'scoped memory for tpu_custom_call.1']
    #allocation8 [shape = 'u8[65536]{0}', space=vmem, size = 0x10000, scoped, tag = 'input window, operand 3, single buffered']
    #allocation9 [shape = 'u8[512]{0}', space=vmem, size = 0x400, scoped, tag = 'output window, operand 0, single buffered']
    %13 = vsyncpa [#allocation4], 0
    %14 = vsyncpa [#allocation7], 0
    %15 = vsyncpa [#allocation5], 0
    // Predicated region
    $region2: #{tpu_custom_call.1} parent=1 // pred_check
      _
    $region3: #{tpu_custom_call.1} parent=1 // pred_check_branch
      %17 = sbr.rel (0) target = $region5
    $region4: #{tpu_custom_call.1} parent=1 // pred_region
      %s19 = ssub.s32 256, 256
      %20 = vsyncadd [#allocation4], %s19
      %s21 = sshll.u32 [#allocation3], 4
      %s22 = int_to_ptr.vmem [resolvable:$true] %s21
      %27 = dma.hbm_to_vmem [thread:$0]  %s0, 256, %s22, [#allocation4], 128, 128, 8
    $region5: #{tpu_custom_call.1} parent=1 // pred_fallthru
      _
    // Predicated region
    $region6: #{tpu_custom_call.1} parent=1 // pred_check
      _
    $region7: #{tpu_custom_call.1} parent=1 // pred_check_branch
      %29 = sbr.rel (0) target = $region9
    $region8: #{tpu_custom_call.1} parent=1 // pred_region
      %s31 = ssub.s32 512, 512
      %32 = vsyncadd [#allocation7], %s31
      %s33 = sshll.u32 [#allocation6], 4
      %s34 = int_to_ptr.vmem [resolvable:$true] %s33
      %39 = dma.hbm_to_vmem [thread:$0]  %s1, 512, %s34, [#allocation7], 128, 128, 8
    $region9: #{tpu_custom_call.1} parent=1 // pred_fallthru
      _
    // Predicated region
    $region10: #{tpu_custom_call.1} parent=1 // pred_check
      _
    $region11: #{tpu_custom_call.1} parent=1 // pred_check_branch
      %41 = sbr.rel (0) target = $region13
    $region12: #{tpu_custom_call.1} parent=1 // pred_region
      _
    $region13: #{tpu_custom_call.1} parent=1 // pred_fallthru
      _
    // Predicated region
    $region14: #{tpu_custom_call.1} parent=1 // pred_check
      _
    $region15: #{tpu_custom_call.1} parent=1 // pred_check_branch
      %43 = sbr.rel (0) target = $region17
    $region16: #{tpu_custom_call.1} parent=1 // pred_region
      %s45 = ssub.s32 2048, 2048
      %46 = vsyncadd [#allocation7], %s45
      %s47 = sshll.u32 [#allocation8], 4
      %s48 = int_to_ptr.vmem [resolvable:$true] %s47
      %53 = dma.hbm_to_vmem [thread:$0]  %s3, 2048, %s48, [#allocation7], 128, 128, 8
    $region17: #{tpu_custom_call.1} parent=1 // pred_fallthru
      _
    // Predicated region
    $region18: #{tpu_custom_call.1} parent=1 // pred_check
      _
    $region19: #{tpu_custom_call.1} parent=1 // pred_check_branch
      %55 = sbr.rel (0) target = $region21
    $region20: #{tpu_custom_call.1} parent=1 // pred_region
      _
    $region21: #{tpu_custom_call.1} parent=1 // pred_fallthru
      _
    // Predicated region
    $region22: #{tpu_custom_call.1} parent=1 // pred_check
      _
    $region23: #{tpu_custom_call.1} parent=1 // pred_check_branch
      %57 = sbr.rel (0) target = $region25
    $region24: #{tpu_custom_call.1} parent=1 // pred_region
      _
    $region25: #{tpu_custom_call.1} parent=1 // pred_fallthru
      _
    // Predicated region
    $region26: #{tpu_custom_call.1} parent=1 // pred_check
      _
    $region27: #{tpu_custom_call.1} parent=1 // pred_check_branch
      %59 = sbr.rel (0) target = $region29
    $region28: #{tpu_custom_call.1} parent=1 // pred_region
      _
    $region29: #{tpu_custom_call.1} parent=1 // pred_fallthru
      _
    // Predicated region
    $region30: #{tpu_custom_call.1} parent=1 // pred_check
      _
    $region31: #{tpu_custom_call.1} parent=1 // pred_check_branch
      %61 = sbr.rel (0) target = $region33
    $region32: #{tpu_custom_call.1} parent=1 // pred_region
      %62 = dma.done [#allocation4], 256
    $region33: #{tpu_custom_call.1} parent=1 // pred_fallthru
      _
    // Predicated region
    $region34: #{tpu_custom_call.1} parent=1 // pred_check
      _
    $region35: #{tpu_custom_call.1} parent=1 // pred_check_branch
      %64 = sbr.rel (0) target = $region37
    $region36: #{tpu_custom_call.1} parent=1 // pred_region
      %65 = dma.done [#allocation7], 512
    $region37: #{tpu_custom_call.1} parent=1 // pred_fallthru
      _
    // Predicated region
    $region38: #{tpu_custom_call.1} parent=1 // pred_check
      _
    $region39: #{tpu_custom_call.1} parent=1 // pred_check_branch
      %67 = sbr.rel (0) target = $region41
    $region40: #{tpu_custom_call.1} parent=1 // pred_region
      %68 = dma.done [#allocation7], 2048
    $region41: #{tpu_custom_call.1} parent=1 // pred_fallthru
      _
    %v70 = vld [vmem:[#allocation3] sm:$0xff]
    %v71 = vld [vmem:[#allocation3 + $0x8] sm:$0xff]
    %v72 = vpack.c.bf16 %v71, %v70
    %v73 = vld [vmem:[#allocation6] sm:$0xff]
    %v74 = vld [vmem:[#allocation6 + $0x8] sm:$0xff]
    %v75 = vld [vmem:[#allocation6 + $0x10] sm:$0xff]
    %v76 = vld [vmem:[#allocation6 + $0x18] sm:$0xff]
    %v77 = vpack.c.bf16 %v74, %v73
    %v78 = vpack.c.bf16 %v76, %v75
    %v79 = vld [vmem:[%s2] sm:$0x1]
    %v81 = vlaneseq
    %v82 = vshrl.u32 %v81, 7
    %v83 = vsub.s32 0, %v82
    %v84 = vrot.slane %v79, %v83
    %vm86 = vcmask 261120
    %v88 = vsel %vm86, %v72, 0
    %90 = vmatprep.subr.bf16.mxu0 0
    %91 = vmatpush1.bf16.msra.mxu0 %v77
    %92 = vmatprep.subr.bf16.mxu0 0
    %93 = vmatpush1.bf16.msra.mxu0 %v78
    %94 = vmatprep.subr.bf16.mxu0 0
    %95 = vmatpush1.bf16.msra.mxu0 0
    %96 = vmatprep.subr.bf16.mxu0 0
    %97 = vmatpush1.bf16.msra.mxu0 0
    %98 = vmatprep.subr.bf16.mxu0 0
    %99 = vmatpush1.bf16.msra.mxu0 0
    %100 = vmatprep.subr.bf16.mxu0 0
    %101 = vmatpush1.bf16.msra.mxu0 0
    %102 = vmatprep.subr.bf16.mxu0 0
    %103 = vmatpush1.bf16.msra.mxu0 0
    %104 = vmatprep.subr.bf16.mxu0 0
    %105 = vmatpush1.bf16.msra.mxu0 0
    %106 = vmatprep.subr.bf16.mxu0 0
    %107 = vmatpush1.bf16.msra.mxu0 0
    %108 = vmatprep.subr.bf16.mxu0 0
    %109 = vmatpush1.bf16.msra.mxu0 0
    %110 = vmatprep.subr.bf16.mxu0 0
    %111 = vmatpush1.bf16.msra.mxu0 0
    %112 = vmatprep.subr.bf16.mxu0 0
    %113 = vmatpush1.bf16.msra.mxu0 0
    %114 = vmatprep.subr.bf16.mxu0 0
    %115 = vmatpush1.bf16.msra.mxu0 0
    %116 = vmatprep.subr.bf16.mxu0 0
    %117 = vmatpush1.bf16.msra.mxu0 0
    %118 = vmatprep.subr.bf16.mxu0 0
    %119 = vmatpush1.bf16.msra.mxu0 0
    %120 = vmatprep.subr.bf16.mxu0 0
    %121 = vmatpush1.bf16.msra.mxu0 0
    %122 = vmatprep.mubr.bf16.mxu0 0
    %123 = vmatmul.mubr.bf16.gmra.mrb[0].mxu0 %v88
    %v124 = vpop.f32.mrb[0].mxu0
    %v125 = vadd.f32 %v84, %v124
    %v126 = vpop.f32.mrb[0].mxu0
    %v127 = vpop.f32.mrb[0].mxu0
    %v128 = vadd.f32 %v84, %v127
    %v129 = vpop.f32.mrb[0].mxu0
    %130 = vdwg.mxu0
    %v131 = vpack.c.bf16 %v128, %v125
    %v132 = vtanh.bf16.pop %v131
    %v133 = vld [vmem:[#allocation8] sm:$0xff]
    %v134 = vld [vmem:[#allocation8 + $0x8] sm:$0xff]
    %v135 = vld [vmem:[#allocation8 + $0x10] sm:$0xff]
    %v136 = vld [vmem:[#allocation8 + $0x18] sm:$0xff]
    %v137 = vld [vmem:[#allocation8 + $0x20] sm:$0xff]
    %v138 = vld [vmem:[#allocation8 + $0x28] sm:$0xff]
    %v139 = vld [vmem:[#allocation8 + $0x30] sm:$0xff]
    %v140 = vld [vmem:[#allocation8 + $0x38] sm:$0xff]
    %v141 = vld [vmem:[#allocation8 + $0x40] sm:$0xff]
    %v142 = vld [vmem:[#allocation8 + $0x48] sm:$0xff]
    %v143 = vld [vmem:[#allocation8 + $0x50] sm:$0xff]
    %v144 = vld [vmem:[#allocation8 + $0x58] sm:$0xff]
    %v145 = vld [vmem:[#allocation8 + $0x60] sm:$0xff]
    %v146 = vld [vmem:[#allocation8 + $0x68] sm:$0xff]
    %v147 = vld [vmem:[#allocation8 + $0x70] sm:$0xff]
    %v148 = vld [vmem:[#allocation8 + $0x78] sm:$0xff]
    %v149 = vpack.c.bf16 %v134, %v133
    %v150 = vpack.c.bf16 %v136, %v135
    %v151 = vpack.c.bf16 %v138, %v137
    %v152 = vpack.c.bf16 %v140, %v139
    %v153 = vpack.c.bf16 %v142, %v141
    %v154 = vpack.c.bf16 %v144, %v143
    %v155 = vpack.c.bf16 %v146, %v145
    %v156 = vpack.c.bf16 %v148, %v147
    %v157 = vld [vmem:[%s4] sm:$0x1]
    %v159 = vlaneseq
    %v160 = vshrl.u32 %v159, 7
    %v161 = vsub.s32 0, %v160
    %v162 = vrot.slane %v157, %v161
    %164 = vmatprep.subr.bf16.mxu0 0
    %165 = vmatpush1.bf16.msra.mxu0 %v149
    %166 = vmatprep.subr.bf16.mxu0 0
    %167 = vmatpush1.bf16.msra.mxu0 %v150
    %168 = vmatprep.subr.bf16.mxu0 0
    %169 = vmatpush1.bf16.msra.mxu0 %v151
    %170 = vmatprep.subr.bf16.mxu0 0
    %171 = vmatpush1.bf16.msra.mxu0 %v152
    %172 = vmatprep.subr.bf16.mxu0 0
    %173 = vmatpush1.bf16.msra.mxu0 %v153
    %174 = vmatprep.subr.bf16.mxu0 0
    %175 = vmatpush1.bf16.msra.mxu0 %v154
    %176 = vmatprep.subr.bf16.mxu0 0
    %177 = vmatpush1.bf16.msra.mxu0 %v155
    %178 = vmatprep.subr.bf16.mxu0 0
    %179 = vmatpush1.bf16.msra.mxu0 %v156
    %180 = vmatprep.subr.bf16.mxu0 0
    %181 = vmatpush1.bf16.msra.mxu0 0
    %182 = vmatprep.subr.bf16.mxu0 0
    %183 = vmatpush1.bf16.msra.mxu0 0
    %184 = vmatprep.subr.bf16.mxu0 0
    %185 = vmatpush1.bf16.msra.mxu0 0
    %186 = vmatprep.subr.bf16.mxu0 0
    %187 = vmatpush1.bf16.msra.mxu0 0
    %188 = vmatprep.subr.bf16.mxu0 0
    %189 = vmatpush1.bf16.msra.mxu0 0
    %190 = vmatprep.subr.bf16.mxu0 0
    %191 = vmatpush1.bf16.msra.mxu0 0
    %192 = vmatprep.subr.bf16.mxu0 0
    %193 = vmatpush1.bf16.msra.mxu0 0
    %194 = vmatprep.subr.bf16.mxu0 0
    %195 = vmatpush1.bf16.msra.mxu0 0
    %196 = vmatprep.mubr.bf16.mxu0 0
    %197 = vmatmul.mubr.bf16.gmra.mrb[0].mxu0 %v132
    %v198 = vpop.f32.mrb[0].mxu0
    %v199 = vadd.f32 %v162, %v198
    %v200 = vpop.f32.mrb[0].mxu0
    %v201 = vpop.f32.mrb[0].mxu0
    %v202 = vadd.f32 %v162, %v201
    %v203 = vpop.f32.mrb[0].mxu0
    %204 = vdwg.mxu0
    %v205 = vpack.c.bf16 %v202, %v199
    %v206 = vtanh.bf16.pop %v205
    %v207 = vld [vmem:[%s5] sm:$0x1]
    %v208 = vpack.c.bf16 %v207, %v207
    %s209 = sld [smem:[#allocation2]]
    %v210 = vstv %s209
    %211 = vmatprep.subr.bf16.mxu0 0
    %212 = vmatpush1.bf16.xpose.msra.mxu0 %v206
    %213 = vmatprep.subr.bf16.mxu0 0
    %214 = vmatpush1.bf16.xpose.msra.mxu0 0
    %215 = vmatprep.subr.bf16.mxu0 0
    %216 = vmatpush1.bf16.xpose.msra.mxu0 0
    %217 = vmatprep.subr.bf16.mxu0 0
    %218 = vmatpush1.bf16.xpose.msra.mxu0 0
    %219 = vmatprep.subr.bf16.mxu0 0
    %220 = vmatpush1.bf16.xpose.msra.mxu0 0
    %221 = vmatprep.subr.bf16.mxu0 0
    %222 = vmatpush1.bf16.xpose.msra.mxu0 0
    %223 = vmatprep.subr.bf16.mxu0 0
    %224 = vmatpush1.bf16.xpose.msra.mxu0 0
    %225 = vmatprep.subr.bf16.mxu0 0
    %226 = vmatpush1.bf16.xpose.msra.mxu0 0
    %227 = vmatprep.subr.bf16.mxu0 0
    %228 = vmatpush1.bf16.xpose.msra.mxu0 0
    %229 = vmatprep.subr.bf16.mxu0 0
    %230 = vmatpush1.bf16.xpose.msra.mxu0 0
    %231 = vmatprep.subr.bf16.mxu0 0
    %232 = vmatpush1.bf16.xpose.msra.mxu0 0
    %233 = vmatprep.subr.bf16.mxu0 0
    %234 = vmatpush1.bf16.xpose.msra.mxu0 0
    %235 = vmatprep.subr.bf16.mxu0 0
    %236 = vmatpush1.bf16.xpose.msra.mxu0 0
    %237 = vmatprep.subr.bf16.mxu0 0
    %238 = vmatpush1.bf16.xpose.msra.mxu0 0
    %239 = vmatprep.subr.bf16.mxu0 0
    %240 = vmatpush1.bf16.xpose.msra.mxu0 0
    %241 = vmatprep.subr.bf16.mxu0 0
    %242 = vmatpush1.bf16.xpose.msra.mxu0 0
    %243 = vmatprep.mubr.bf16.mxu0 0
    %244 = vmatmul.mubr.bf16.gmra.mrb[0].mxu0 %v208
    %v245 = vpop.f32.mrb[0].mxu0
    %v246 = vadd.f32 %v210, %v245
    %v247 = vpop.f32.mrb[0].mxu0
    %v248 = vpop.f32.mrb[0].mxu0
    %v249 = vpop.f32.mrb[0].mxu0
    %250 = vdwg.mxu0
    %vm251 = vcmask 122880
    %252 = vst.msk [vmem:[#allocation9] sm:$0x1] %vm251, %v246
    // Predicated region
    $region42: #{tpu_custom_call.1} parent=1 // pred_check
      _
    $region43: #{tpu_custom_call.1} parent=1 // pred_check_branch
      %254 = sbr.rel (0) target = $region45
    $region44: #{tpu_custom_call.1} parent=1 // pred_region
      %s256 = ssub.s32 16, 16
      %257 = vsyncadd [#allocation5], %s256
      %s259 = sshll.u32 [#allocation9], 4
      %s260 = int_to_ptr.vmem [resolvable:$true] %s259
      %262 = dma.vmem_to_hbm [thread:$0]  %s260, 16, %s7, [#allocation5]
    $region45: #{tpu_custom_call.1} parent=1 // pred_fallthru
      _
    // Predicated region
    $region46: #{tpu_custom_call.1} parent=1 // pred_check
      _
    $region47: #{tpu_custom_call.1} parent=1 // pred_check_branch
      %264 = sbr.rel (0) target = $region49
    $region48: #{tpu_custom_call.1} parent=1 // pred_region
      %265 = dma.done [#allocation5], 16
    $region49: #{tpu_custom_call.1} parent=1 // pred_fallthru
      _
    %266 = vsyncpa [#allocation4], 1
    %267 = vsyncpa [#allocation7], 1
    %268 = vsyncpa [#allocation5], 1

</llo_original>
